<compile_context>
chip_gen: v5e
topology: v5e:2x2
jax: 0.10.0
libtpu: 0.0.40
codegen_flags: <defaults>
</compile_context>

<pallas_src>
import jax
import jax.numpy as jnp
from jax.experimental import pallas as pl
from jax.experimental.pallas import tpu as pltpu

# ---- demo config (small, synthetic; kernel itself is shape-parameterized) ----
BATCH = 2
SEQ = 8
HIDDEN = 32          # config.hidden_size        (real RoBERTa: 768)
INTERMEDIATE = 64    # config.intermediate_size  (real RoBERTa: 3072)
ADAPTER = 16         # config.adapter_size
LN_EPS = 1e-12       # config.layer_norm_eps
# adapter_type = 'pfeiffer' -> relu activation + pre-adapter LayerNorm.
# TODO(synk): nn.Dropout is treated as identity (eval/inference mode); no in-kernel RNG mask.
# TODO(synk): only the pfeiffer (relu) adapter branch is fused; houlsby (swish, no pre-LN)
#             would need a one-line change in the kernel body.


def _cdiv(a, b):
    return (a + b - 1) // b


def _round_up(a, b):
    return _cdiv(a, b) * b


def _tpu_vmem_bytes():
    """Physical VMEM per core; conservative (v7x, 64 MiB) if the query is unavailable."""
    try:
        return int(pltpu.get_tpu_info().vmem_capacity_bytes)
    except Exception:
        return 64 << 20


def roberta_output_kernel(h_ref, inp_ref,
                          wd_ref, wa_ref, wb_ref,
                          vec_ref, ba_ref,
                          o_ref):
    """One row-tile of the fused dense + LN + adapter + LN forward."""
    # vec_ref packs four small (1, H) vectors into one block (one DMA instead of four):
    #   row 0 = dense bias, row 1 = LN gamma, row 2 = LN beta, row 3 = adapter_B bias
    bd = vec_ref[0:1, :]
    gamma = vec_ref[1:2, :]
    beta = vec_ref[2:3, :]
    bb = vec_ref[3:4, :]
    ba = ba_ref[...]

    def layer_norm(x):                      # f32 statistics throughout
        mu = jnp.mean(x, axis=-1, keepdims=True)
        xc = x - mu
        var = jnp.mean(xc * xc, axis=-1, keepdims=True)
        return xc * jax.lax.rsqrt(var + LN_EPS) * gamma + beta

    inp = inp_ref[...].astype(jnp.float32)

    # dense: Linear(intermediate -> hidden). hidden_states arrives as bf16 from HBM,
    # so this is a bf16 x bf16 -> f32 MXU matmul with no in-kernel cast of the big tile.
    h = jnp.dot(h_ref[...], wd_ref[...], preferred_element_type=jnp.float32) + bd
    # dropout: identity in eval mode.

    # s = dense_out + input_tensor. Reused twice:
    #   LN1 input, and (residual + input_tensor) inside the final LN.
    s = h + inp

    # pfeiffer: pre-adapter LayerNorm(h + input_tensor)
    x = layer_norm(s)

    # Adapter: B(relu(A(x)))   (relu because adapter_type != 'houlsby').
    # Adapter width is zero-padded to a lane-dense multiple of 128 in the wrapper;
    # padded columns are exactly zero through relu and contribute nothing in adapter_B.
    a = jnp.dot(x.astype(jnp.bfloat16), wa_ref[...],
                preferred_element_type=jnp.float32) + ba
    a = jnp.maximum(a, 0.0)
    y = jnp.dot(a.astype(jnp.bfloat16), wb_ref[...],
                preferred_element_type=jnp.float32) + bb

    # output LayerNorm(adapter_out + residual + input_tensor) = LN(y + h + inp) = LN(y + s)
    o_ref[...] = layer_norm(y + s).astype(o_ref.dtype)


def roberta_output(hidden_states, input_tensor, params, row_tile=None):
    """hidden_states: (B, S, I), input_tensor: (B, S, H) -> (B, S, H)."""
    B, S, I = hidden_states.shape
    H = input_tensor.shape[-1]
    M = B * S
    out_dtype = input_tensor.dtype

    wd, bd, g, beta, wa, ba, wb, bb = params
    R = wa.shape[-1]
    Rp = _round_up(R, 128)          # lane-dense adapter width (zero-padded)

    # Weights in bf16 for the MXU; biases / LN params stay f32.
    wd_bf = wd.astype(jnp.bfloat16)
    wa_bf = jnp.pad(wa, ((0, 0), (0, Rp - R))).astype(jnp.bfloat16)
    wb_bf = jnp.pad(wb, ((0, Rp - R), (0, 0))).astype(jnp.bfloat16)
    ba_p = jnp.pad(ba.astype(jnp.float32), ((0, 0), (0, Rp - R)))
    vec = jnp.concatenate([bd, g, beta, bb], axis=0).astype(jnp.float32)   # (4, H)

    # Stream the dominant (M, I) activation as bf16: halves its HBM traffic and VMEM.
    h2d = hidden_states.reshape(M, I).astype(jnp.bfloat16)
    in2d = input_tensor.reshape(M, H).astype(jnp.float32)

    # Row tile:
    #  * small problems -> one full-size tile (block dim == full array dim is legal)
    #  * large problems -> >= 4 grid steps so "parallel" feeds both v7x TensorCores
    #    and the pipeline has blocks to prefetch; cap shrinks on 64 MiB-VMEM chips.
    # No host-side padding: a ragged final block is clipped by Pallas; LN is per-row,
    # so stale rows in the last tile never affect valid outputs (writes are masked).
    phys_vmem = _tpu_vmem_bytes()
    max_tm = 256 if phys_vmem <= (64 << 20) else 512
    if row_tile is not None:
        tm = row_tile
    elif M <= 256:
        tm = M
    else:
        tm = min(max_tm, _round_up(_cdiv(M, 4), 8))
    grid_m = _cdiv(M, tm)

    # VMEM budget: pipelined tiles + single-buffered weights + in-kernel f32 temporaries,
    # clamped per chip (48 MiB on v7x's 64 MiB physical VMEM, 96 MiB on 128 MiB chips).
    out_bytes = jnp.dtype(out_dtype).itemsize
    est = (2 * tm * I * 2                      # bf16 hidden_states tile, double-buffered
           + 2 * tm * H * 4                    # f32 input_tensor tile, double-buffered
           + 2 * tm * H * out_bytes            # output tile, double-buffered
           + (I * H + H * Rp + Rp * H) * 2     # bf16 weights (single-buffered)
           + (4 * H + Rp) * 4                  # packed bias/LN vectors
           + (6 * tm * H + tm * Rp) * 4)       # in-kernel f32 temporaries (s, x, a, y, ...)
    cap = (96 << 20) if phys_vmem >= (128 << 20) else (48 << 20)
    vmem_limit = int(max(32 << 20, min(int(1.25 * est) + (2 << 20), cap)))

    def _run(weight_mode):
        if weight_mode is None:
            w_spec = lambda shape: pl.BlockSpec(shape, lambda i: (0, 0))
        else:
            w_spec = lambda shape: pl.BlockSpec(shape, lambda i: (0, 0),
                                                pipeline_mode=weight_mode)
        return pl.pallas_call(
            roberta_output_kernel,
            out_shape=jax.ShapeDtypeStruct((M, H), out_dtype),
            grid=(grid_m,),
            in_specs=[
                pl.BlockSpec((tm, I), lambda i: (i, 0)),   # hidden_states row tile (bf16)
                pl.BlockSpec((tm, H), lambda i: (i, 0)),   # input_tensor row tile (f32)
                w_spec((I, H)),                            # dense weight     (transposed, bf16)
                w_spec((H, Rp)),                           # adapter_A weight (transposed, bf16)
                w_spec((Rp, H)),                           # adapter_B weight (transposed, bf16)
                pl.BlockSpec((4, H), lambda i: (0, 0)),    # [dense bias; gamma; beta; adapter_B bias]
                pl.BlockSpec((1, Rp), lambda i: (0, 0)),   # adapter_A bias (padded)
            ],
            out_specs=pl.BlockSpec((tm, H), lambda i: (i, 0)),
            compiler_params=pltpu.CompilerParams(
                dimension_semantics=("parallel",),   # shards row tiles across v7x's 2 TCs
                vmem_limit_bytes=vmem_limit),
        )(h2d, in2d, wd_bf, wa_bf, wb_bf, vec, ba_p)

    try:
        # Grid-invariant weights: request single-buffering to save VMEM headroom.
        out = _run(pl.Buffered(1))
    except Exception:
        # pipeline_mode not supported by this jax build -> default double-buffering.
        out = _run(None)

    return out.reshape(B, S, H)


def reference(hidden_states, input_tensor, params):
    """Pure-JAX reference mirroring the kernel's bf16-matmul / f32-LN numerics."""
    wd, bd, g, beta, wa, ba, wb, bb = params

    def ln(x):
        mu = jnp.mean(x, axis=-1, keepdims=True)
        var = jnp.mean((x - mu) ** 2, axis=-1, keepdims=True)
        return (x - mu) * jax.lax.rsqrt(var + LN_EPS) * g[0] + beta[0]

    def mm(x, w):
        return jnp.dot(x.astype(jnp.bfloat16), w.astype(jnp.bfloat16),
                       preferred_element_type=jnp.float32)

    h = mm(hidden_states, wd) + bd[0]
    residual = h
    x = ln(h + input_tensor)
    a = jnp.maximum(mm(x, wa) + ba[0], 0.0)
    x = mm(a, wb) + bb[0] + residual
    return ln(x + input_tensor)


if __name__ == "__main__":
    key = jax.random.PRNGKey(0)
    ks = jax.random.split(key, 10)

    # PyTorch Linear weight is (out, in); stored here already transposed to (in, out).
    wd = jax.random.normal(ks[0], (INTERMEDIATE, HIDDEN), jnp.float32) * 0.02
    bd = jax.random.normal(ks[1], (1, HIDDEN), jnp.float32) * 0.02
    g = jnp.ones((1, HIDDEN), jnp.float32)
    beta = jnp.zeros((1, HIDDEN), jnp.float32)
    wa = jax.random.normal(ks[2], (HIDDEN, ADAPTER), jnp.float32) * 0.02
    ba = jax.random.normal(ks[3], (1, ADAPTER), jnp.float32) * 0.02
    wb = jax.random.normal(ks[4], (ADAPTER, HIDDEN), jnp.float32) * 0.02
    bb = jax.random.normal(ks[5], (1, HIDDEN), jnp.float32) * 0.02
    params = (wd, bd, g, beta, wa, ba, wb, bb)

    hidden_states = jax.random.normal(ks[6], (BATCH, SEQ, INTERMEDIATE), jnp.float32)
    input_tensor = jax.random.normal(ks[7], (BATCH, SEQ, HIDDEN), jnp.float32)

    out = roberta_output(hidden_states, input_tensor, params)
    out = jax.block_until_ready(out)

    ref = reference(hidden_states, input_tensor, params)
    assert out.shape == (BATCH, SEQ, HIDDEN)
    # Both sides use bf16 matmuls with f32 accumulation; tolerance covers add-order diffs.
    assert jnp.allclose(out, ref, atol=2e-3, rtol=2e-3), "mismatch vs reference"

    print("KERNEL_OK")
</pallas_src>

<mosaic_0001>
module attributes {stable_mosaic.version = 11 : i64} {
  func.func @roberta_output_kernel(%arg0: i32, %arg1: memref<16x64xbf16, #tpu.memory_space<vmem>>, %arg2: memref<16x32xf32, #tpu.memory_space<vmem>>, %arg3: memref<64x32xbf16, #tpu.memory_space<vmem>>, %arg4: memref<32x128xbf16, #tpu.memory_space<vmem>>, %arg5: memref<128x32xbf16, #tpu.memory_space<vmem>>, %arg6: memref<4x32xf32, #tpu.memory_space<vmem>>, %arg7: memref<1x128xf32, #tpu.memory_space<vmem>>, %arg8: memref<16x32xf32, #tpu.memory_space<vmem>>) attributes {dimension_semantics = [#tpu.dimension_semantics<parallel>], iteration_bounds = array<i64: 1>, scalar_prefetch = 0 : i64, scratch_operands = 0 : i64, tpu.core_type = #tpu.core_type<tc>, window_params = [{transform_indices = @transform_0, window_bounds = array<i64: 16, 64>}, {transform_indices = @transform_1, window_bounds = array<i64: 16, 32>}, {pipeline_mode = #tpu.pipeline_mode<synchronous>, transform_indices = @transform_2, window_bounds = array<i64: 64, 32>}, {pipeline_mode = #tpu.pipeline_mode<synchronous>, transform_indices = @transform_3, window_bounds = array<i64: 32, 128>}, {pipeline_mode = #tpu.pipeline_mode<synchronous>, transform_indices = @transform_4, window_bounds = array<i64: 128, 32>}, {pipeline_mode = #tpu.pipeline_mode<synchronous>, transform_indices = @transform_5, window_bounds = array<i64: 4, 32>}, {pipeline_mode = #tpu.pipeline_mode<synchronous>, transform_indices = @transform_6, window_bounds = array<i64: 1, 128>}, {transform_indices = @transform_7, window_bounds = array<i64: 16, 32>}]} {
    %c0 = arith.constant 0 : index
    %c0_0 = arith.constant 0 : index
    %0 = vector.load %arg6[%c0, %c0_0] : memref<4x32xf32, #tpu.memory_space<vmem>>, vector<1x32xf32>
    %c1 = arith.constant 1 : index
    %c0_1 = arith.constant 0 : index
    %1 = vector.load %arg6[%c1, %c0_1] : memref<4x32xf32, #tpu.memory_space<vmem>>, vector<1x32xf32>
    %c2 = arith.constant 2 : index
    %c0_2 = arith.constant 0 : index
    %2 = vector.load %arg6[%c2, %c0_2] : memref<4x32xf32, #tpu.memory_space<vmem>>, vector<1x32xf32>
    %c3 = arith.constant 3 : index
    %c0_3 = arith.constant 0 : index
    %3 = vector.load %arg6[%c3, %c0_3] : memref<4x32xf32, #tpu.memory_space<vmem>>, vector<1x32xf32>
    %c0_4 = arith.constant 0 : index
    %c0_5 = arith.constant 0 : index
    %4 = vector.load %arg7[%c0_4, %c0_5] : memref<1x128xf32, #tpu.memory_space<vmem>>, vector<1x128xf32>
    %c0_6 = arith.constant 0 : index
    %c0_7 = arith.constant 0 : index
    %5 = vector.load %arg2[%c0_6, %c0_7] : memref<16x32xf32, #tpu.memory_space<vmem>>, vector<16x32xf32>
    %c0_8 = arith.constant 0 : index
    %c0_9 = arith.constant 0 : index
    %6 = vector.load %arg1[%c0_8, %c0_9] : memref<16x64xbf16, #tpu.memory_space<vmem>>, vector<16x64xbf16>
    %c0_10 = arith.constant 0 : index
    %c0_11 = arith.constant 0 : index
    %7 = vector.load %arg3[%c0_10, %c0_11] : memref<64x32xbf16, #tpu.memory_space<vmem>>, vector<64x32xbf16>
    %cst = arith.constant dense<0.000000e+00> : vector<16x32xf32>
    %8 = tpu.matmul %6, %7, %cst {dimension_numbers = #tpu.dot_dimension_numbers<[1], [0], [0], [1], [0, 0, 1, 1], [], []>} : vector<16x64xbf16>, vector<64x32xbf16>, vector<16x32xf32> -> vector<16x32xf32>
    %9 = vector.broadcast %0 : vector<1x32xf32> to vector<16x32xf32>
    %10 = arith.addf %8, %9 : vector<16x32xf32>
    %11 = arith.addf %10, %5 : vector<16x32xf32>
    %cst_12 = arith.constant dense<0.000000e+00> : vector<16xf32>
    %12 = vector.multi_reduction <add>, %11, %cst_12 [1] : vector<16x32xf32> to vector<16xf32>
    %13 = vector.shape_cast %12 : vector<16xf32> to vector<16x1xf32>
    %cst_13 = arith.constant 3.200000e+01 : f32
    %14 = vector.broadcast %cst_13 : f32 to vector<16x1xf32>
    %15 = arith.divf %13, %14 : vector<16x1xf32>
    %16 = vector.broadcast %15 : vector<16x1xf32> to vector<16x32xf32>
    %17 = arith.subf %11, %16 : vector<16x32xf32>
    %18 = arith.mulf %17, %17 : vector<16x32xf32>
    %cst_14 = arith.constant dense<0.000000e+00> : vector<16xf32>
    %19 = vector.multi_reduction <add>, %18, %cst_14 [1] : vector<16x32xf32> to vector<16xf32>
    %20 = vector.shape_cast %19 : vector<16xf32> to vector<16x1xf32>
    %cst_15 = arith.constant 3.200000e+01 : f32
    %21 = vector.broadcast %cst_15 : f32 to vector<16x1xf32>
    %22 = arith.divf %20, %21 : vector<16x1xf32>
    %cst_16 = arith.constant 9.99999996E-13 : f32
    %23 = vector.broadcast %cst_16 : f32 to vector<16x1xf32>
    %24 = arith.addf %22, %23 : vector<16x1xf32>
    %25 = math.rsqrt %24 : vector<16x1xf32>
    %26 = vector.broadcast %25 : vector<16x1xf32> to vector<16x32xf32>
    %27 = arith.mulf %17, %26 : vector<16x32xf32>
    %28 = vector.broadcast %1 : vector<1x32xf32> to vector<16x32xf32>
    %29 = arith.mulf %27, %28 : vector<16x32xf32>
    %30 = vector.broadcast %2 : vector<1x32xf32> to vector<16x32xf32>
    %31 = arith.addf %29, %30 : vector<16x32xf32>
    %32 = arith.truncf %31 : vector<16x32xf32> to vector<16x32xbf16>
    %c0_17 = arith.constant 0 : index
    %c0_18 = arith.constant 0 : index
    %33 = vector.load %arg4[%c0_17, %c0_18] : memref<32x128xbf16, #tpu.memory_space<vmem>>, vector<32x128xbf16>
    %cst_19 = arith.constant dense<0.000000e+00> : vector<16x128xf32>
    %34 = tpu.matmul %32, %33, %cst_19 {dimension_numbers = #tpu.dot_dimension_numbers<[1], [0], [0], [1], [0, 0, 1, 1], [], []>} : vector<16x32xbf16>, vector<32x128xbf16>, vector<16x128xf32> -> vector<16x128xf32>
    %35 = vector.broadcast %4 : vector<1x128xf32> to vector<16x128xf32>
    %36 = arith.addf %34, %35 : vector<16x128xf32>
    %cst_20 = arith.constant 0.000000e+00 : f32
    %37 = vector.broadcast %cst_20 : f32 to vector<16x128xf32>
    %38 = arith.maximumf %36, %37 : vector<16x128xf32>
    %39 = arith.truncf %38 : vector<16x128xf32> to vector<16x128xbf16>
    %c0_21 = arith.constant 0 : index
    %c0_22 = arith.constant 0 : index
    %40 = vector.load %arg5[%c0_21, %c0_22] : memref<128x32xbf16, #tpu.memory_space<vmem>>, vector<128x32xbf16>
    %cst_23 = arith.constant dense<0.000000e+00> : vector<16x32xf32>
    %41 = tpu.matmul %39, %40, %cst_23 {dimension_numbers = #tpu.dot_dimension_numbers<[1], [0], [0], [1], [0, 0, 1, 1], [], []>} : vector<16x128xbf16>, vector<128x32xbf16>, vector<16x32xf32> -> vector<16x32xf32>
    %42 = vector.broadcast %3 : vector<1x32xf32> to vector<16x32xf32>
    %43 = arith.addf %41, %42 : vector<16x32xf32>
    %44 = arith.addf %43, %11 : vector<16x32xf32>
    %cst_24 = arith.constant dense<0.000000e+00> : vector<16xf32>
    %45 = vector.multi_reduction <add>, %44, %cst_24 [1] : vector<16x32xf32> to vector<16xf32>
    %46 = vector.shape_cast %45 : vector<16xf32> to vector<16x1xf32>
    %cst_25 = arith.constant 3.200000e+01 : f32
    %47 = vector.broadcast %cst_25 : f32 to vector<16x1xf32>
    %48 = arith.divf %46, %47 : vector<16x1xf32>
    %49 = vector.broadcast %48 : vector<16x1xf32> to vector<16x32xf32>
    %50 = arith.subf %44, %49 : vector<16x32xf32>
    %51 = arith.mulf %50, %50 : vector<16x32xf32>
    %cst_26 = arith.constant dense<0.000000e+00> : vector<16xf32>
    %52 = vector.multi_reduction <add>, %51, %cst_26 [1] : vector<16x32xf32> to vector<16xf32>
    %53 = vector.shape_cast %52 : vector<16xf32> to vector<16x1xf32>
    %cst_27 = arith.constant 3.200000e+01 : f32
    %54 = vector.broadcast %cst_27 : f32 to vector<16x1xf32>
    %55 = arith.divf %53, %54 : vector<16x1xf32>
    %cst_28 = arith.constant 9.99999996E-13 : f32
    %56 = vector.broadcast %cst_28 : f32 to vector<16x1xf32>
    %57 = arith.addf %55, %56 : vector<16x1xf32>
    %58 = math.rsqrt %57 : vector<16x1xf32>
    %59 = vector.broadcast %58 : vector<16x1xf32> to vector<16x32xf32>
    %60 = arith.mulf %50, %59 : vector<16x32xf32>
    %61 = vector.broadcast %1 : vector<1x32xf32> to vector<16x32xf32>
    %62 = arith.mulf %60, %61 : vector<16x32xf32>
    %63 = vector.broadcast %2 : vector<1x32xf32> to vector<16x32xf32>
    %64 = arith.addf %62, %63 : vector<16x32xf32>
    %c0_29 = arith.constant 0 : index
    %c0_30 = arith.constant 0 : index
    %65 = vector.load %arg8[%c0_29, %c0_30] : memref<16x32xf32, #tpu.memory_space<vmem>>, vector<16x32xf32>
    tpu.vector_store %arg8[%c0_29, %c0_30], %64 {strides = array<i32>} : memref<16x32xf32, #tpu.memory_space<vmem>>, vector<16x32xf32>,
    return
  }
  func.func @transform_0(%arg0: i32) -> (i32, i32) {
    %c0_i32 = arith.constant 0 : i32
    %c0_i32_0 = arith.constant 0 : i32
    return %arg0, %c0_i32 : i32, i32
  }
  func.func @transform_1(%arg0: i32) -> (i32, i32) {
    %c0_i32 = arith.constant 0 : i32
    %c0_i32_0 = arith.constant 0 : i32
    return %arg0, %c0_i32 : i32, i32
  }
  func.func @transform_2(%arg0: i32) -> (i32, i32) {
    %c0_i32 = arith.constant 0 : i32
    %c0_i32_0 = arith.constant 0 : i32
    %c0_i32_1 = arith.constant 0 : i32
    return %c0_i32, %c0_i32_0 : i32, i32
  }
  func.func @transform_3(%arg0: i32) -> (i32, i32) {
    %c0_i32 = arith.constant 0 : i32
    %c0_i32_0 = arith.constant 0 : i32
    %c0_i32_1 = arith.constant 0 : i32
    return %c0_i32, %c0_i32_0 : i32, i32
  }
  func.func @transform_4(%arg0: i32) -> (i32, i32) {
    %c0_i32 = arith.constant 0 : i32
    %c0_i32_0 = arith.constant 0 : i32
    %c0_i32_1 = arith.constant 0 : i32
    return %c0_i32, %c0_i32_0 : i32, i32
  }
  func.func @transform_5(%arg0: i32) -> (i32, i32) {
    %c0_i32 = arith.constant 0 : i32
    %c0_i32_0 = arith.constant 0 : i32
    %c0_i32_1 = arith.constant 0 : i32
    return %c0_i32, %c0_i32_0 : i32, i32
  }
  func.func @transform_6(%arg0: i32) -> (i32, i32) {
    %c0_i32 = arith.constant 0 : i32
    %c0_i32_0 = arith.constant 0 : i32
    %c0_i32_1 = arith.constant 0 : i32
    return %c0_i32, %c0_i32_0 : i32, i32
  }
  func.func @transform_7(%arg0: i32) -> (i32, i32) {
    %c0_i32 = arith.constant 0 : i32
    %c0_i32_0 = arith.constant 0 : i32
    return %arg0, %c0_i32 : i32, i32
  }
}

module attributes {stable_mosaic.version = 11 : i64} {
  func.func @roberta_output_kernel(%arg0: i32, %arg1: memref<16x64xbf16, #tpu.memory_space<vmem>>, %arg2: memref<16x32xf32, #tpu.memory_space<vmem>>, %arg3: memref<64x32xbf16, #tpu.memory_space<vmem>>, %arg4: memref<32x128xbf16, #tpu.memory_space<vmem>>, %arg5: memref<128x32xbf16, #tpu.memory_space<vmem>>, %arg6: memref<4x32xf32, #tpu.memory_space<vmem>>, %arg7: memref<1x128xf32, #tpu.memory_space<vmem>>, %arg8: memref<16x32xf32, #tpu.memory_space<vmem>>) attributes {dimension_semantics = [#tpu.dimension_semantics<parallel>], iteration_bounds = array<i64: 1>, scalar_prefetch = 0 : i64, scratch_operands = 0 : i64, tpu.core_type = #tpu.core_type<tc>, window_params = [{transform_indices = @transform_0, window_bounds = array<i64: 16, 64>}, {transform_indices = @transform_1, window_bounds = array<i64: 16, 32>}, {pipeline_mode = #tpu.pipeline_mode<synchronous>, transform_indices = @transform_2, window_bounds = array<i64: 64, 32>}, {pipeline_mode = #tpu.pipeline_mode<synchronous>, transform_indices = @transform_3, window_bounds = array<i64: 32, 128>}, {pipeline_mode = #tpu.pipeline_mode<synchronous>, transform_indices = @transform_4, window_bounds = array<i64: 128, 32>}, {pipeline_mode = #tpu.pipeline_mode<synchronous>, transform_indices = @transform_5, window_bounds = array<i64: 4, 32>}, {pipeline_mode = #tpu.pipeline_mode<synchronous>, transform_indices = @transform_6, window_bounds = array<i64: 1, 128>}, {transform_indices = @transform_7, window_bounds = array<i64: 16, 32>}]} {
    %c0 = arith.constant 0 : index
    %c0_0 = arith.constant 0 : index
    %0 = vector.load %arg6[%c0, %c0_0] : memref<4x32xf32, #tpu.memory_space<vmem>>, vector<1x32xf32>
    %c1 = arith.constant 1 : index
    %c0_1 = arith.constant 0 : index
    %1 = vector.load %arg6[%c1, %c0_1] : memref<4x32xf32, #tpu.memory_space<vmem>>, vector<1x32xf32>
    %c2 = arith.constant 2 : index
    %c0_2 = arith.constant 0 : index
    %2 = vector.load %arg6[%c2, %c0_2] : memref<4x32xf32, #tpu.memory_space<vmem>>, vector<1x32xf32>
    %c3 = arith.constant 3 : index
    %c0_3 = arith.constant 0 : index
    %3 = vector.load %arg6[%c3, %c0_3] : memref<4x32xf32, #tpu.memory_space<vmem>>, vector<1x32xf32>
    %c0_4 = arith.constant 0 : index
    %c0_5 = arith.constant 0 : index
    %4 = vector.load %arg7[%c0_4, %c0_5] : memref<1x128xf32, #tpu.memory_space<vmem>>, vector<1x128xf32>
    %c0_6 = arith.constant 0 : index
    %c0_7 = arith.constant 0 : index
    %5 = vector.load %arg2[%c0_6, %c0_7] : memref<16x32xf32, #tpu.memory_space<vmem>>, vector<16x32xf32>
    %c0_8 = arith.constant 0 : index
    %c0_9 = arith.constant 0 : index
    %6 = vector.load %arg1[%c0_8, %c0_9] : memref<16x64xbf16, #tpu.memory_space<vmem>>, vector<16x64xbf16>
    %c0_10 = arith.constant 0 : index
    %c0_11 = arith.constant 0 : index
    %7 = vector.load %arg3[%c0_10, %c0_11] : memref<64x32xbf16, #tpu.memory_space<vmem>>, vector<64x32xbf16>
    %cst = arith.constant dense<0.000000e+00> : vector<16x32xf32>
    %8 = tpu.matmul %6, %7, %cst {dimension_numbers = #tpu.dot_dimension_numbers<[1], [0], [0], [1], [0, 0, 1, 1], [], []>} : vector<16x64xbf16>, vector<64x32xbf16>, vector<16x32xf32> -> vector<16x32xf32>
    %9 = vector.broadcast %0 : vector<1x32xf32> to vector<16x32xf32>
    %10 = arith.addf %8, %9 : vector<16x32xf32>
    %11 = arith.addf %10, %5 : vector<16x32xf32>
    %cst_12 = arith.constant dense<0.000000e+00> : vector<16xf32>
    %12 = vector.multi_reduction <add>, %11, %cst_12 [1] : vector<16x32xf32> to vector<16xf32>
    %13 = vector.shape_cast %12 : vector<16xf32> to vector<16x1xf32>
    %cst_13 = arith.constant 3.200000e+01 : f32
    %14 = vector.broadcast %cst_13 : f32 to vector<16x1xf32>
    %15 = arith.divf %13, %14 : vector<16x1xf32>
    %16 = vector.broadcast %15 : vector<16x1xf32> to vector<16x32xf32>
    %17 = arith.subf %11, %16 : vector<16x32xf32>
    %18 = arith.mulf %17, %17 : vector<16x32xf32>
    %cst_14 = arith.constant dense<0.000000e+00> : vector<16xf32>
    %19 = vector.multi_reduction <add>, %18, %cst_14 [1] : vector<16x32xf32> to vector<16xf32>
    %20 = vector.shape_cast %19 : vector<16xf32> to vector<16x1xf32>
    %cst_15 = arith.constant 3.200000e+01 : f32
    %21 = vector.broadcast %cst_15 : f32 to vector<16x1xf32>
    %22 = arith.divf %20, %21 : vector<16x1xf32>
    %cst_16 = arith.constant 9.99999996E-13 : f32
    %23 = vector.broadcast %cst_16 : f32 to vector<16x1xf32>
    %24 = arith.addf %22, %23 : vector<16x1xf32>
    %25 = math.rsqrt %24 : vector<16x1xf32>
    %26 = vector.broadcast %25 : vector<16x1xf32> to vector<16x32xf32>
    %27 = arith.mulf %17, %26 : vector<16x32xf32>
    %28 = vector.broadcast %1 : vector<1x32xf32> to vector<16x32xf32>
    %29 = arith.mulf %27, %28 : vector<16x32xf32>
    %30 = vector.broadcast %2 : vector<1x32xf32> to vector<16x32xf32>
    %31 = arith.addf %29, %30 : vector<16x32xf32>
    %32 = arith.truncf %31 : vector<16x32xf32> to vector<16x32xbf16>
    %c0_17 = arith.constant 0 : index
    %c0_18 = arith.constant 0 : index
    %33 = vector.load %arg4[%c0_17, %c0_18] : memref<32x128xbf16, #tpu.memory_space<vmem>>, vector<32x128xbf16>
    %cst_19 = arith.constant dense<0.000000e+00> : vector<16x128xf32>
    %34 = tpu.matmul %32, %33, %cst_19 {dimension_numbers = #tpu.dot_dimension_numbers<[1], [0], [0], [1], [0, 0, 1, 1], [], []>} : vector<16x32xbf16>, vector<32x128xbf16>, vector<16x128xf32> -> vector<16x128xf32>
    %35 = vector.broadcast %4 : vector<1x128xf32> to vector<16x128xf32>
    %36 = arith.addf %34, %35 : vector<16x128xf32>
    %cst_20 = arith.constant 0.000000e+00 : f32
    %37 = vector.broadcast %cst_20 : f32 to vector<16x128xf32>
    %38 = arith.maximumf %36, %37 : vector<16x128xf32>
    %39 = arith.truncf %38 : vector<16x128xf32> to vector<16x128xbf16>
    %c0_21 = arith.constant 0 : index
    %c0_22 = arith.constant 0 : index
    %40 = vector.load %arg5[%c0_21, %c0_22] : memref<128x32xbf16, #tpu.memory_space<vmem>>, vector<128x32xbf16>
    %cst_23 = arith.constant dense<0.000000e+00> : vector<16x32xf32>
    %41 = tpu.matmul %39, %40, %cst_23 {dimension_numbers = #tpu.dot_dimension_numbers<[1], [0], [0], [1], [0, 0, 1, 1], [], []>} : vector<16x128xbf16>, vector<128x32xbf16>, vector<16x32xf32> -> vector<16x32xf32>
    %42 = vector.broadcast %3 : vector<1x32xf32> to vector<16x32xf32>
    %43 = arith.addf %41, %42 : vector<16x32xf32>
    %44 = arith.addf %43, %11 : vector<16x32xf32>
    %cst_24 = arith.constant dense<0.000000e+00> : vector<16xf32>
    %45 = vector.multi_reduction <add>, %44, %cst_24 [1] : vector<16x32xf32> to vector<16xf32>
    %46 = vector.shape_cast %45 : vector<16xf32> to vector<16x1xf32>
    %cst_25 = arith.constant 3.200000e+01 : f32
    %47 = vector.broadcast %cst_25 : f32 to vector<16x1xf32>
    %48 = arith.divf %46, %47 : vector<16x1xf32>
    %49 = vector.broadcast %48 : vector<16x1xf32> to vector<16x32xf32>
    %50 = arith.subf %44, %49 : vector<16x32xf32>
    %51 = arith.mulf %50, %50 : vector<16x32xf32>
    %cst_26 = arith.constant dense<0.000000e+00> : vector<16xf32>
    %52 = vector.multi_reduction <add>, %51, %cst_26 [1] : vector<16x32xf32> to vector<16xf32>
    %53 = vector.shape_cast %52 : vector<16xf32> to vector<16x1xf32>
    %cst_27 = arith.constant 3.200000e+01 : f32
    %54 = vector.broadcast %cst_27 : f32 to vector<16x1xf32>
    %55 = arith.divf %53, %54 : vector<16x1xf32>
    %cst_28 = arith.constant 9.99999996E-13 : f32
    %56 = vector.broadcast %cst_28 : f32 to vector<16x1xf32>
    %57 = arith.addf %55, %56 : vector<16x1xf32>
    %58 = math.rsqrt %57 : vector<16x1xf32>
    %59 = vector.broadcast %58 : vector<16x1xf32> to vector<16x32xf32>
    %60 = arith.mulf %50, %59 : vector<16x32xf32>
    %61 = vector.broadcast %1 : vector<1x32xf32> to vector<16x32xf32>
    %62 = arith.mulf %60, %61 : vector<16x32xf32>
    %63 = vector.broadcast %2 : vector<1x32xf32> to vector<16x32xf32>
    %64 = arith.addf %62, %63 : vector<16x32xf32>
    %c0_29 = arith.constant 0 : index
    %c0_30 = arith.constant 0 : index
    %65 = vector.load %arg8[%c0_29, %c0_30] : memref<16x32xf32, #tpu.memory_space<vmem>>, vector<16x32xf32>
    tpu.vector_store %arg8[%c0_29, %c0_30], %64 {strides = array<i32>} : memref<16x32xf32, #tpu.memory_space<vmem>>, vector<16x32xf32>,
    return
  }
  func.func @transform_0(%arg0: i32) -> (i32, i32) {
    %c0_i32 = arith.constant 0 : i32
    %c0_i32_0 = arith.constant 0 : i32
    return %arg0, %c0_i32 : i32, i32
  }
  func.func @transform_1(%arg0: i32) -> (i32, i32) {
    %c0_i32 = arith.constant 0 : i32
    %c0_i32_0 = arith.constant 0 : i32
    return %arg0, %c0_i32 : i32, i32
  }
  func.func @transform_2(%arg0: i32) -> (i32, i32) {
    %c0_i32 = arith.constant 0 : i32
    %c0_i32_0 = arith.constant 0 : i32
    %c0_i32_1 = arith.constant 0 : i32
    return %c0_i32, %c0_i32_0 : i32, i32
  }
  func.func @transform_3(%arg0: i32) -> (i32, i32) {
    %c0_i32 = arith.constant 0 : i32
    %c0_i32_0 = arith.constant 0 : i32
    %c0_i32_1 = arith.constant 0 : i32
    return %c0_i32, %c0_i32_0 : i32, i32
  }
  func.func @transform_4(%arg0: i32) -> (i32, i32) {
    %c0_i32 = arith.constant 0 : i32
    %c0_i32_0 = arith.constant 0 : i32
    %c0_i32_1 = arith.constant 0 : i32
    return %c0_i32, %c0_i32_0 : i32, i32
  }
  func.func @transform_5(%arg0: i32) -> (i32, i32) {
    %c0_i32 = arith.constant 0 : i32
    %c0_i32_0 = arith.constant 0 : i32
    %c0_i32_1 = arith.constant 0 : i32
    return %c0_i32, %c0_i32_0 : i32, i32
  }
  func.func @transform_6(%arg0: i32) -> (i32, i32) {
    %c0_i32 = arith.constant 0 : i32
    %c0_i32_0 = arith.constant 0 : i32
    %c0_i32_1 = arith.constant 0 : i32
    return %c0_i32, %c0_i32_0 : i32, i32
  }
  func.func @transform_7(%arg0: i32) -> (i32, i32) {
    %c0_i32 = arith.constant 0 : i32
    %c0_i32_0 = arith.constant 0 : i32
    return %arg0, %c0_i32 : i32, i32
  }
}

</mosaic_0001>

<llo_original>
// kernel: tpu_custom_call.1
$region0: #{tpu_custom_call.1}
  #allocation0 [shape = 'u32[]', space=smem, size = 0x4, offset = 0x4, fixed_abs, tag = 'smem constant byte address 0x4 - core index']
  #allocation1 [shape = 'u32[72,128]{1,0:T(1,128)}', space=vmem, size = 0x9000, scoped, tag = 'internal scratch']
  %s0 = inlined_call_operand.vmem [shape: bf16[16,64], index: 0, kind: input, shape index: {}]
  %s1 = inlined_call_operand.vmem [shape: f32[16,32], index: 1, kind: input, shape index: {}]
  %s2 = inlined_call_operand.vmem [shape: bf16[64,32], index: 2, kind: input, shape index: {}]
  %s3 = inlined_call_operand.vmem [shape: bf16[32,128], index: 3, kind: input, shape index: {}]
  %s4 = inlined_call_operand.vmem [shape: bf16[128,32], index: 4, kind: input, shape index: {}]
  %s5 = inlined_call_operand.vmem [shape: f32[4,32], index: 5, kind: input, shape index: {}]
  %s6 = inlined_call_operand.vmem [shape: f32[1,128], index: 6, kind: input, shape index: {}]
  %s7 = inlined_call_operand.hbm [shape: f32[16,32], index: 7, kind: output, shape index: {}]
  %s8 = sld [smem:[#allocation0]]
  $region38: #{tpu_custom_call.1} parent=0
    _
  %s10 = ssub.s32 1, %s8
  %s11 = scalar_select 0, %s10, %s8
  $region1: #{tpu_custom_call.1} parent=0
    #allocation2 [shape = 'u8[8192]{0}', space=vmem, size = 0x2000, scoped, tag = 'output window, operand 0, single buffered']
    #allocation3 [shape = 's32[1]{0}', space=sflag, size = 0x4, scoped, tag = 'scoped memory for tpu_custom_call.1']
    %12 = vsyncpa [#allocation3], 0
    // Predicated region
    $region2: #{tpu_custom_call.1} parent=1 // pred_check
      _
    $region3: #{tpu_custom_call.1} parent=1 // pred_check_branch
      %14 = sbr.rel (0) target = $region5
    $region4: #{tpu_custom_call.1} parent=1 // pred_region
      _
    $region5: #{tpu_custom_call.1} parent=1 // pred_fallthru
      _
    // Predicated region
    $region6: #{tpu_custom_call.1} parent=1 // pred_check
      _
    $region7: #{tpu_custom_call.1} parent=1 // pred_check_branch
      %16 = sbr.rel (0) target = $region9
    $region8: #{tpu_custom_call.1} parent=1 // pred_region
      _
    $region9: #{tpu_custom_call.1} parent=1 // pred_fallthru
      _
    // Predicated region
    $region10: #{tpu_custom_call.1} parent=1 // pred_check
      _
    $region11: #{tpu_custom_call.1} parent=1 // pred_check_branch
      %18 = sbr.rel (0) target = $region13
    $region12: #{tpu_custom_call.1} parent=1 // pred_region
      _
    $region13: #{tpu_custom_call.1} parent=1 // pred_fallthru
      _
    // Predicated region
    $region14: #{tpu_custom_call.1} parent=1 // pred_check
      _
    $region15: #{tpu_custom_call.1} parent=1 // pred_check_branch
      %20 = sbr.rel (0) target = $region17
    $region16: #{tpu_custom_call.1} parent=1 // pred_region
      _
    $region17: #{tpu_custom_call.1} parent=1 // pred_fallthru
      _
    // Predicated region
    $region18: #{tpu_custom_call.1} parent=1 // pred_check
      _
    $region19: #{tpu_custom_call.1} parent=1 // pred_check_branch
      %22 = sbr.rel (0) target = $region21
    $region20: #{tpu_custom_call.1} parent=1 // pred_region
      _
    $region21: #{tpu_custom_call.1} parent=1 // pred_fallthru
      _
    // Predicated region
    $region22: #{tpu_custom_call.1} parent=1 // pred_check
      _
    $region23: #{tpu_custom_call.1} parent=1 // pred_check_branch
      %24 = sbr.rel (0) target = $region25
    $region24: #{tpu_custom_call.1} parent=1 // pred_region
      _
    $region25: #{tpu_custom_call.1} parent=1 // pred_fallthru
      _
    // Predicated region
    $region26: #{tpu_custom_call.1} parent=1 // pred_check
      _
    $region27: #{tpu_custom_call.1} parent=1 // pred_check_branch
      %26 = sbr.rel (0) target = $region29
    $region28: #{tpu_custom_call.1} parent=1 // pred_region
      _
    $region29: #{tpu_custom_call.1} parent=1 // pred_fallthru
      _
    %v28 = vld [vmem:[%s5] sm:$0x1]
    %v29 = vld [vmem:[%s5 + $0x1] sm:$0x1]
    %v30 = vld [vmem:[%s5 + $0x2] sm:$0x1]
    %v31 = vld [vmem:[%s5 + $0x3] sm:$0x1]
    %v32 = vld [vmem:[%s6] sm:$0x1]
    %v33 = vld [vmem:[%s1] sm:$0xff]
    %v34 = vld [vmem:[%s1 + $0x8] sm:$0xff]
    %v35 = vld [vmem:[%s0] sm:$0xf]
    %v36 = vld [vmem:[%s0 + $0x4] sm:$0xf]
    %v37 = vld [vmem:[%s2] sm:$0xf]
    %v38 = vld [vmem:[%s2 + $0x4] sm:$0xf]
    %v39 = vld [vmem:[%s2 + $0x8] sm:$0xf]
    %v40 = vld [vmem:[%s2 + $0xc] sm:$0xf]
    %v41 = vld [vmem:[%s2 + $0x10] sm:$0xf]
    %v42 = vld [vmem:[%s2 + $0x14] sm:$0xf]
    %v43 = vld [vmem:[%s2 + $0x18] sm:$0xf]
    %v44 = vld [vmem:[%s2 + $0x1c] sm:$0xf]
    %v45 = vperm.slane %v28, 0
    %v48 = vunpack.c.l.b16 %v35
    %v49 = vunpack.c.l.b16 %v36
    %v50 = vpack.c.b16 %v49, %v48
    %v59 = vunpack.c.l.b16 %v37
    %v60 = vunpack.c.l.b16 %v38
    %v61 = vunpack.c.l.b16 %v39
    %v62 = vunpack.c.l.b16 %v40
    %v63 = vunpack.c.l.b16 %v41
    %v64 = vunpack.c.l.b16 %v42
    %v65 = vunpack.c.l.b16 %v43
    %v66 = vunpack.c.l.b16 %v44
    %v67 = vpack.c.b16 %v60, %v59
    %v68 = vpack.c.b16 %v62, %v61
    %v69 = vpack.c.b16 %v64, %v63
    %v70 = vpack.c.b16 %v66, %v65
    %vm75 = vcmask 523264
    %v77 = vsel %vm75, %v50, 0
    %79 = vmatpush.bf16.msra.mxu0 0
    %80 = vmatpush.bf16.msra.mxu0 0
    %81 = vmatpush.bf16.msra.mxu0 0
    %82 = vmatpush.bf16.msra.mxu0 0
    %83 = vmatpush.bf16.msra.mxu0 %v70
    %84 = vmatpush.bf16.msra.mxu0 %v69
    %85 = vmatpush.bf16.msra.mxu0 %v68
    %86 = vmatpush.bf16.msra.mxu0 %v67
    %87 = vmatmul.bf16.gmra.mxu0 %v77
    %v88 = vpop.f32.mrf.mxu0
    %v89 = vadd.f32 %v45, %v88
    %v90 = vpop.f32.mrf.mxu0
    %v91 = vadd.f32 %v45, %v90
    %92 = vdwg.mxu0
    %v93 = vadd.f32 %v89, %v33
    %v94 = vadd.f32 %v91, %v34
    %vm95 = vcmask 261120
    %v96 = vsel %vm95, %v93, 0.0
    %97 = vadd.xlane.f32.xlu0 %v96
    %v98 = vpop.xlane.xlu0 %97
    %v99 = vsel %vm95, %v94, 0.0
    %100 = vadd.xlane.f32.xlu0 %v99
    %v101 = vpop.xlane.xlu0 %100
    %v102 = vrcp.pop 32.0
    %v103 = vmul.f32 32.0, %v102
    %v104 = vsub.f32 1.0, %v103
    %v105 = vmul.f32 %v102, %v104
    %v106 = vadd.f32 %v102, %v105
    %vm107 = vweird.f32 %v102
    %v108 = vsel %vm107, %v102, %v106
    %v109 = vmul.f32 %v98, %v108
    %v110 = vmul.f32 %v101, %v108
    %v111 = vsub.f32 %v93, %v109
    %v112 = vsub.f32 %v94, %v110
    %v113 = vmul.f32 %v111, %v111
    %v114 = vmul.f32 %v112, %v112
    %v115 = vsel %vm95, %v113, 0.0
    %116 = vadd.xlane.f32.xlu0 %v115
    %v117 = vpop.xlane.xlu0 %116
    %v118 = vsel %vm95, %v114, 0.0
    %119 = vadd.xlane.f32.xlu0 %v118
    %v120 = vpop.xlane.xlu0 %119
    %v121 = vmul.f32 %v117, %v108
    %v122 = vmul.f32 %v120, %v108
    %v123 = vadd.f32 %v121, 1e-12
    %v124 = vadd.f32 %v122, 1e-12
    %v125 = vrsqrt.pop %v123
    %v126 = vmul.f32 %v125, %v123
    %v127 = vmul.f32 %v126, %v125
    %v128 = vmul.f32 0.5, %v127
    %v129 = vsub.f32 1.5, %v128
    %v130 = vmul.f32 %v125, %v129
    %vm131 = vweird.f32 %v123
    %vm132 = vweird.f32 %v125
    %vm133 = vmor %vm131, %vm132
    %v134 = vsel %vm133, %v125, %v130
    %v135 = vrsqrt.pop %v124
    %v136 = vmul.f32 %v135, %v124
    %v137 = vmul.f32 %v136, %v135
    %v138 = vmul.f32 0.5, %v137
    %v139 = vsub.f32 1.5, %v138
    %v140 = vmul.f32 %v135, %v139
    %vm141 = vweird.f32 %v124
    %vm142 = vweird.f32 %v135
    %vm143 = vmor %vm141, %vm142
    %v144 = vsel %vm143, %v135, %v140
    %v145 = vmul.f32 %v111, %v134
    %v146 = vmul.f32 %v112, %v144
    %v147 = vperm.slane %v29, 0
    %v148 = vmul.f32 %v145, %v147
    %v149 = vmul.f32 %v146, %v147
    %v150 = vperm.slane %v30, 0
    %v151 = vadd.f32 %v148, %v150
    %v152 = vadd.f32 %v149, %v150
    %v153 = vpack.c.bf16 %v152, %v151
    %v154 = vld [vmem:[%s3] sm:$0xf]
    %v155 = vld [vmem:[%s3 + $0x4] sm:$0xf]
    %v156 = vld [vmem:[%s3 + $0x8] sm:$0xf]
    %v157 = vld [vmem:[%s3 + $0xc] sm:$0xf]
    %v159 = vperm.slane %v32, 0
    %v165 = vunpack.c.l.b16 %v154
    %v166 = vunpack.c.l.b16 %v155
    %v167 = vunpack.c.l.b16 %v156
    %v168 = vunpack.c.l.b16 %v157
    %v169 = vpack.c.b16 %v166, %v165
    %v170 = vpack.c.b16 %v168, %v167
    %v174 = vsel %vm95, %v153, 0
    %176 = vmatpush.bf16.msra.mxu0 0
    %177 = vmatpush.bf16.msra.mxu0 0
    %178 = vmatpush.bf16.msra.mxu0 0
    %179 = vmatpush.bf16.msra.mxu0 0
    %180 = vmatpush.bf16.msra.mxu0 0
    %181 = vmatpush.bf16.msra.mxu0 0
    %182 = vmatpush.bf16.msra.mxu0 %v170
    %183 = vmatpush.bf16.msra.mxu0 %v169
    %184 = vmatmul.bf16.gmra.mxu0 %v174
    %v185 = vpop.f32.mrf.mxu0
    %v186 = vadd.f32 %v159, %v185
    %v187 = vpop.f32.mrf.mxu0
    %v188 = vadd.f32 %v159, %v187
    %189 = vdwg.mxu0
    %v190 = vmax.f32 %v186, 0.0
    %v191 = vmax.f32 %v188, 0.0
    %v192 = vpack.c.bf16 %v191, %v190
    %v193 = vld [vmem:[%s4] sm:$0xf]
    %v194 = vld [vmem:[%s4 + $0x4] sm:$0xf]
    %v195 = vld [vmem:[%s4 + $0x8] sm:$0xf]
    %v196 = vld [vmem:[%s4 + $0xc] sm:$0xf]
    %v197 = vld [vmem:[%s4 + $0x10] sm:$0xf]
    %v198 = vld [vmem:[%s4 + $0x14] sm:$0xf]
    %v199 = vld [vmem:[%s4 + $0x18] sm:$0xf]
    %v200 = vld [vmem:[%s4 + $0x1c] sm:$0xf]
    %v201 = vld [vmem:[%s4 + $0x20] sm:$0xf]
    %v202 = vld [vmem:[%s4 + $0x24] sm:$0xf]
    %v203 = vld [vmem:[%s4 + $0x28] sm:$0xf]
    %v204 = vld [vmem:[%s4 + $0x2c] sm:$0xf]
    %v205 = vld [vmem:[%s4 + $0x30] sm:$0xf]
    %v206 = vld [vmem:[%s4 + $0x34] sm:$0xf]
    %v207 = vld [vmem:[%s4 + $0x38] sm:$0xf]
    %v208 = vld [vmem:[%s4 + $0x3c] sm:$0xf]
    %v209 = vperm.slane %v31, 0
    %v226 = vunpack.c.l.b16 %v193
    %v227 = vunpack.c.l.b16 %v194
    %v228 = vunpack.c.l.b16 %v195
    %v229 = vunpack.c.l.b16 %v196
    %v230 = vunpack.c.l.b16 %v197
    %v231 = vunpack.c.l.b16 %v198
    %v232 = vunpack.c.l.b16 %v199
    %v233 = vunpack.c.l.b16 %v200
    %v234 = vunpack.c.l.b16 %v201
    %v235 = vunpack.c.l.b16 %v202
    %v236 = vunpack.c.l.b16 %v203
    %v237 = vunpack.c.l.b16 %v204
    %v238 = vunpack.c.l.b16 %v205
    %v239 = vunpack.c.l.b16 %v206
    %v240 = vunpack.c.l.b16 %v207
    %v241 = vunpack.c.l.b16 %v208
    %v242 = vpack.c.b16 %v227, %v226
    %v243 = vpack.c.b16 %v229, %v228
    %v244 = vpack.c.b16 %v231, %v230
    %v245 = vpack.c.b16 %v233, %v232
    %v246 = vpack.c.b16 %v235, %v234
    %v247 = vpack.c.b16 %v237, %v236
    %v248 = vpack.c.b16 %v239, %v238
    %v249 = vpack.c.b16 %v241, %v240
    %258 = vmatpush.bf16.msra.mxu0 %v249
    %259 = vmatpush.bf16.msra.mxu0 %v248
    %260 = vmatpush.bf16.msra.mxu0 %v247
    %261 = vmatpush.bf16.msra.mxu0 %v246
    %262 = vmatpush.bf16.msra.mxu0 %v245
    %263 = vmatpush.bf16.msra.mxu0 %v244
    %264 = vmatpush.bf16.msra.mxu0 %v243
    %265 = vmatpush.bf16.msra.mxu0 %v242
    %266 = vmatmul.bf16.gmra.mxu0 %v192
    %v267 = vpop.f32.mrf.mxu0
    %v268 = vadd.f32 %v209, %v267
    %v269 = vpop.f32.mrf.mxu0
    %v270 = vadd.f32 %v209, %v269
    %271 = vdwg.mxu0
    %v272 = vadd.f32 %v268, %v93
    %v273 = vadd.f32 %v270, %v94
    %v274 = vsel %vm95, %v272, 0.0
    %275 = vadd.xlane.f32.xlu0 %v274
    %v276 = vpop.xlane.xlu0 %275
    %v277 = vsel %vm95, %v273, 0.0
    %278 = vadd.xlane.f32.xlu0 %v277
    %v279 = vpop.xlane.xlu0 %278
    %v280 = vmul.f32 %v276, %v108
    %v281 = vmul.f32 %v279, %v108
    %v282 = vsub.f32 %v272, %v280
    %v283 = vsub.f32 %v273, %v281
    %v284 = vmul.f32 %v282, %v282
    %v285 = vmul.f32 %v283, %v283
    %v286 = vsel %vm95, %v284, 0.0
    %287 = vadd.xlane.f32.xlu0 %v286
    %v288 = vpop.xlane.xlu0 %287
    %v289 = vsel %vm95, %v285, 0.0
    %290 = vadd.xlane.f32.xlu0 %v289
    %v291 = vpop.xlane.xlu0 %290
    %v292 = vmul.f32 %v288, %v108
    %v293 = vmul.f32 %v291, %v108
    %v294 = vadd.f32 %v292, 1e-12
    %v295 = vadd.f32 %v293, 1e-12
    %v296 = vrsqrt.pop %v294
    %v297 = vmul.f32 %v296, %v294
    %v298 = vmul.f32 %v297, %v296
    %v299 = vmul.f32 0.5, %v298
    %v300 = vsub.f32 1.5, %v299
    %v301 = vmul.f32 %v296, %v300
    %vm302 = vweird.f32 %v294
    %vm303 = vweird.f32 %v296
    %vm304 = vmor %vm302, %vm303
    %v305 = vsel %vm304, %v296, %v301
    %v306 = vrsqrt.pop %v295
    %v307 = vmul.f32 %v306, %v295
    %v308 = vmul.f32 %v307, %v306
    %v309 = vmul.f32 0.5, %v308
    %v310 = vsub.f32 1.5, %v309
    %v311 = vmul.f32 %v306, %v310
    %vm312 = vweird.f32 %v295
    %vm313 = vweird.f32 %v306
    %vm314 = vmor %vm312, %vm313
    %v315 = vsel %vm314, %v306, %v311
    %v316 = vmul.f32 %v282, %v305
    %v317 = vmul.f32 %v283, %v315
    %v318 = vmul.f32 %v316, %v147
    %v319 = vmul.f32 %v317, %v147
    %v320 = vadd.f32 %v318, %v150
    %v321 = vadd.f32 %v319, %v150
    %322 = vst.msk [vmem:[#allocation2] sm:$0xff] %vm95, %v320
    %323 = vst.msk [vmem:[#allocation2 + $0x8] sm:$0xff] %vm95, %v321
    // Predicated region
    $region30: #{tpu_custom_call.1} parent=1 // pred_check
      _
    $region31: #{tpu_custom_call.1} parent=1 // pred_check_branch
      %325 = sbr.rel (0) target = $region33
    $region32: #{tpu_custom_call.1} parent=1 // pred_region
      %327 = vsyncadd [#allocation3], 0
      %s328 = sshll.u32 [#allocation2], 4
      %s329 = int_to_ptr.vmem [resolvable:$true] %s328
      %s330 = sshll.u32 %s7, 4
      %s331 = int_to_ptr.hbm [resolvable:$true] %s330
      %336 = dma.vmem_to_hbm [thread:$0]  %s329, 256, %s331, [#allocation3], 128, 128, 8
    $region33: #{tpu_custom_call.1} parent=1 // pred_fallthru
      _
    // Predicated region
    $region34: #{tpu_custom_call.1} parent=1 // pred_check
      _
    $region35: #{tpu_custom_call.1} parent=1 // pred_check_branch
      %338 = sbr.rel (0) target = $region37
    $region36: #{tpu_custom_call.1} parent=1 // pred_region
      %340 = dma.done [#allocation3], 256
    $region37: #{tpu_custom_call.1} parent=1 // pred_fallthru
      _
    %341 = vsyncpa [#allocation3], 1

// kernel: tpu_custom_call.1
$region0: #{tpu_custom_call.1}
  #allocation0 [shape = 'u32[]', space=smem, size = 0x4, offset = 0x4, fixed_abs, tag = 'smem constant byte address 0x4 - core index']
  #allocation1 [shape = 'u32[72,128]{1,0:T(1,128)}', space=vmem, size = 0x9000, scoped, tag = 'internal scratch']
  %s0 = inlined_call_operand.vmem [shape: bf16[16,64], index: 0, kind: input, shape index: {}]
  %s1 = inlined_call_operand.vmem [shape: f32[16,32], index: 1, kind: input, shape index: {}]
  %s2 = inlined_call_operand.vmem [shape: bf16[64,32], index: 2, kind: input, shape index: {}]
  %s3 = inlined_call_operand.vmem [shape: bf16[32,128], index: 3, kind: input, shape index: {}]
  %s4 = inlined_call_operand.vmem [shape: bf16[128,32], index: 4, kind: input, shape index: {}]
  %s5 = inlined_call_operand.vmem [shape: f32[4,32], index: 5, kind: input, shape index: {}]
  %s6 = inlined_call_operand.vmem [shape: f32[1,128], index: 6, kind: input, shape index: {}]
  %s7 = inlined_call_operand.hbm [shape: f32[16,32], index: 7, kind: output, shape index: {}]
  %s8 = sld [smem:[#allocation0]]
  $region38: #{tpu_custom_call.1} parent=0
    _
  %s10 = ssub.s32 1, %s8
  %s11 = scalar_select 0, %s10, %s8
  $region1: #{tpu_custom_call.1} parent=0
    #allocation2 [shape = 'u8[8192]{0}', space=vmem, size = 0x2000, scoped, tag = 'output window, operand 0, single buffered']
    #allocation3 [shape = 's32[1]{0}', space=sflag, size = 0x4, scoped, tag = 'scoped memory for tpu_custom_call.1']
    %12 = vsyncpa [#allocation3], 0
    // Predicated region
    $region2: #{tpu_custom_call.1} parent=1 // pred_check
      _
    $region3: #{tpu_custom_call.1} parent=1 // pred_check_branch
      %14 = sbr.rel (0) target = $region5
    $region4: #{tpu_custom_call.1} parent=1 // pred_region
      _
    $region5: #{tpu_custom_call.1} parent=1 // pred_fallthru
      _
    // Predicated region
    $region6: #{tpu_custom_call.1} parent=1 // pred_check
      _
    $region7: #{tpu_custom_call.1} parent=1 // pred_check_branch
      %16 = sbr.rel (0) target = $region9
    $region8: #{tpu_custom_call.1} parent=1 // pred_region
      _
    $region9: #{tpu_custom_call.1} parent=1 // pred_fallthru
      _
    // Predicated region
    $region10: #{tpu_custom_call.1} parent=1 // pred_check
      _
    $region11: #{tpu_custom_call.1} parent=1 // pred_check_branch
      %18 = sbr.rel (0) target = $region13
    $region12: #{tpu_custom_call.1} parent=1 // pred_region
      _
    $region13: #{tpu_custom_call.1} parent=1 // pred_fallthru
      _
    // Predicated region
    $region14: #{tpu_custom_call.1} parent=1 // pred_check
      _
    $region15: #{tpu_custom_call.1} parent=1 // pred_check_branch
      %20 = sbr.rel (0) target = $region17
    $region16: #{tpu_custom_call.1} parent=1 // pred_region
      _
    $region17: #{tpu_custom_call.1} parent=1 // pred_fallthru
      _
    // Predicated region
    $region18: #{tpu_custom_call.1} parent=1 // pred_check
      _
    $region19: #{tpu_custom_call.1} parent=1 // pred_check_branch
      %22 = sbr.rel (0) target = $region21
    $region20: #{tpu_custom_call.1} parent=1 // pred_region
      _
    $region21: #{tpu_custom_call.1} parent=1 // pred_fallthru
      _
    // Predicated region
    $region22: #{tpu_custom_call.1} parent=1 // pred_check
      _
    $region23: #{tpu_custom_call.1} parent=1 // pred_check_branch
      %24 = sbr.rel (0) target = $region25
    $region24: #{tpu_custom_call.1} parent=1 // pred_region
      _
    $region25: #{tpu_custom_call.1} parent=1 // pred_fallthru
      _
    // Predicated region
    $region26: #{tpu_custom_call.1} parent=1 // pred_check
      _
    $region27: #{tpu_custom_call.1} parent=1 // pred_check_branch
      %26 = sbr.rel (0) target = $region29
    $region28: #{tpu_custom_call.1} parent=1 // pred_region
      _
    $region29: #{tpu_custom_call.1} parent=1 // pred_fallthru
      _
    %v28 = vld [vmem:[%s5] sm:$0x1]
    %v29 = vld [vmem:[%s5 + $0x1] sm:$0x1]
    %v30 = vld [vmem:[%s5 + $0x2] sm:$0x1]
    %v31 = vld [vmem:[%s5 + $0x3] sm:$0x1]
    %v32 = vld [vmem:[%s6] sm:$0x1]
    %v33 = vld [vmem:[%s1] sm:$0xff]
    %v34 = vld [vmem:[%s1 + $0x8] sm:$0xff]
    %v35 = vld [vmem:[%s0] sm:$0xf]
    %v36 = vld [vmem:[%s0 + $0x4] sm:$0xf]
    %v37 = vld [vmem:[%s2] sm:$0xf]
    %v38 = vld [vmem:[%s2 + $0x4] sm:$0xf]
    %v39 = vld [vmem:[%s2 + $0x8] sm:$0xf]
    %v40 = vld [vmem:[%s2 + $0xc] sm:$0xf]
    %v41 = vld [vmem:[%s2 + $0x10] sm:$0xf]
    %v42 = vld [vmem:[%s2 + $0x14] sm:$0xf]
    %v43 = vld [vmem:[%s2 + $0x18] sm:$0xf]
    %v44 = vld [vmem:[%s2 + $0x1c] sm:$0xf]
    %v45 = vperm.slane %v28, 0
    %v48 = vunpack.c.l.b16 %v35
    %v49 = vunpack.c.l.b16 %v36
    %v50 = vpack.c.b16 %v49, %v48
    %v59 = vunpack.c.l.b16 %v37
    %v60 = vunpack.c.l.b16 %v38
    %v61 = vunpack.c.l.b16 %v39
    %v62 = vunpack.c.l.b16 %v40
    %v63 = vunpack.c.l.b16 %v41
    %v64 = vunpack.c.l.b16 %v42
    %v65 = vunpack.c.l.b16 %v43
    %v66 = vunpack.c.l.b16 %v44
    %v67 = vpack.c.b16 %v60, %v59
    %v68 = vpack.c.b16 %v62, %v61
    %v69 = vpack.c.b16 %v64, %v63
    %v70 = vpack.c.b16 %v66, %v65
    %vm75 = vcmask 523264
    %v77 = vsel %vm75, %v50, 0
    %79 = vmatpush.bf16.msra.mxu0 0
    %80 = vmatpush.bf16.msra.mxu0 0
    %81 = vmatpush.bf16.msra.mxu0 0
    %82 = vmatpush.bf16.msra.mxu0 0
    %83 = vmatpush.bf16.msra.mxu0 %v70
    %84 = vmatpush.bf16.msra.mxu0 %v69
    %85 = vmatpush.bf16.msra.mxu0 %v68
    %86 = vmatpush.bf16.msra.mxu0 %v67
    %87 = vmatmul.bf16.gmra.mxu0 %v77
    %v88 = vpop.f32.mrf.mxu0
    %v89 = vadd.f32 %v45, %v88
    %v90 = vpop.f32.mrf.mxu0
    %v91 = vadd.f32 %v45, %v90
    %92 = vdwg.mxu0
    %v93 = vadd.f32 %v89, %v33
    %v94 = vadd.f32 %v91, %v34
    %vm95 = vcmask 261120
    %v96 = vsel %vm95, %v93, 0.0
    %97 = vadd.xlane.f32.xlu0 %v96
    %v98 = vpop.xlane.xlu0 %97
    %v99 = vsel %vm95, %v94, 0.0
    %100 = vadd.xlane.f32.xlu0 %v99
    %v101 = vpop.xlane.xlu0 %100
    %v102 = vrcp.pop 32.0
    %v103 = vmul.f32 32.0, %v102
    %v104 = vsub.f32 1.0, %v103
    %v105 = vmul.f32 %v102, %v104
    %v106 = vadd.f32 %v102, %v105
    %vm107 = vweird.f32 %v102
    %v108 = vsel %vm107, %v102, %v106
    %v109 = vmul.f32 %v98, %v108
    %v110 = vmul.f32 %v101, %v108
    %v111 = vsub.f32 %v93, %v109
    %v112 = vsub.f32 %v94, %v110
    %v113 = vmul.f32 %v111, %v111
    %v114 = vmul.f32 %v112, %v112
    %v115 = vsel %vm95, %v113, 0.0
    %116 = vadd.xlane.f32.xlu0 %v115
    %v117 = vpop.xlane.xlu0 %116
    %v118 = vsel %vm95, %v114, 0.0
    %119 = vadd.xlane.f32.xlu0 %v118
    %v120 = vpop.xlane.xlu0 %119
    %v121 = vmul.f32 %v117, %v108
    %v122 = vmul.f32 %v120, %v108
    %v123 = vadd.f32 %v121, 1e-12
    %v124 = vadd.f32 %v122, 1e-12
    %v125 = vrsqrt.pop %v123
    %v126 = vmul.f32 %v125, %v123
    %v127 = vmul.f32 %v126, %v125
    %v128 = vmul.f32 0.5, %v127
    %v129 = vsub.f32 1.5, %v128
    %v130 = vmul.f32 %v125, %v129
    %vm131 = vweird.f32 %v123
    %vm132 = vweird.f32 %v125
    %vm133 = vmor %vm131, %vm132
    %v134 = vsel %vm133, %v125, %v130
    %v135 = vrsqrt.pop %v124
    %v136 = vmul.f32 %v135, %v124
    %v137 = vmul.f32 %v136, %v135
    %v138 = vmul.f32 0.5, %v137
    %v139 = vsub.f32 1.5, %v138
    %v140 = vmul.f32 %v135, %v139
    %vm141 = vweird.f32 %v124
    %vm142 = vweird.f32 %v135
    %vm143 = vmor %vm141, %vm142
    %v144 = vsel %vm143, %v135, %v140
    %v145 = vmul.f32 %v111, %v134
    %v146 = vmul.f32 %v112, %v144
    %v147 = vperm.slane %v29, 0
    %v148 = vmul.f32 %v145, %v147
    %v149 = vmul.f32 %v146, %v147
    %v150 = vperm.slane %v30, 0
    %v151 = vadd.f32 %v148, %v150
    %v152 = vadd.f32 %v149, %v150
    %v153 = vpack.c.bf16 %v152, %v151
    %v154 = vld [vmem:[%s3] sm:$0xf]
    %v155 = vld [vmem:[%s3 + $0x4] sm:$0xf]
    %v156 = vld [vmem:[%s3 + $0x8] sm:$0xf]
    %v157 = vld [vmem:[%s3 + $0xc] sm:$0xf]
    %v159 = vperm.slane %v32, 0
    %v165 = vunpack.c.l.b16 %v154
    %v166 = vunpack.c.l.b16 %v155
    %v167 = vunpack.c.l.b16 %v156
    %v168 = vunpack.c.l.b16 %v157
    %v169 = vpack.c.b16 %v166, %v165
    %v170 = vpack.c.b16 %v168, %v167
    %v174 = vsel %vm95, %v153, 0
    %176 = vmatpush.bf16.msra.mxu0 0
    %177 = vmatpush.bf16.msra.mxu0 0
    %178 = vmatpush.bf16.msra.mxu0 0
    %179 = vmatpush.bf16.msra.mxu0 0
    %180 = vmatpush.bf16.msra.mxu0 0
    %181 = vmatpush.bf16.msra.mxu0 0
    %182 = vmatpush.bf16.msra.mxu0 %v170
    %183 = vmatpush.bf16.msra.mxu0 %v169
    %184 = vmatmul.bf16.gmra.mxu0 %v174
    %v185 = vpop.f32.mrf.mxu0
    %v186 = vadd.f32 %v159, %v185
    %v187 = vpop.f32.mrf.mxu0
    %v188 = vadd.f32 %v159, %v187
    %189 = vdwg.mxu0
    %v190 = vmax.f32 %v186, 0.0
    %v191 = vmax.f32 %v188, 0.0
    %v192 = vpack.c.bf16 %v191, %v190
    %v193 = vld [vmem:[%s4] sm:$0xf]
    %v194 = vld [vmem:[%s4 + $0x4] sm:$0xf]
    %v195 = vld [vmem:[%s4 + $0x8] sm:$0xf]
    %v196 = vld [vmem:[%s4 + $0xc] sm:$0xf]
    %v197 = vld [vmem:[%s4 + $0x10] sm:$0xf]
    %v198 = vld [vmem:[%s4 + $0x14] sm:$0xf]
    %v199 = vld [vmem:[%s4 + $0x18] sm:$0xf]
    %v200 = vld [vmem:[%s4 + $0x1c] sm:$0xf]
    %v201 = vld [vmem:[%s4 + $0x20] sm:$0xf]
    %v202 = vld [vmem:[%s4 + $0x24] sm:$0xf]
    %v203 = vld [vmem:[%s4 + $0x28] sm:$0xf]
    %v204 = vld [vmem:[%s4 + $0x2c] sm:$0xf]
    %v205 = vld [vmem:[%s4 + $0x30] sm:$0xf]
    %v206 = vld [vmem:[%s4 + $0x34] sm:$0xf]
    %v207 = vld [vmem:[%s4 + $0x38] sm:$0xf]
    %v208 = vld [vmem:[%s4 + $0x3c] sm:$0xf]
    %v209 = vperm.slane %v31, 0
    %v226 = vunpack.c.l.b16 %v193
    %v227 = vunpack.c.l.b16 %v194
    %v228 = vunpack.c.l.b16 %v195
    %v229 = vunpack.c.l.b16 %v196
    %v230 = vunpack.c.l.b16 %v197
    %v231 = vunpack.c.l.b16 %v198
    %v232 = vunpack.c.l.b16 %v199
    %v233 = vunpack.c.l.b16 %v200
    %v234 = vunpack.c.l.b16 %v201
    %v235 = vunpack.c.l.b16 %v202
    %v236 = vunpack.c.l.b16 %v203
    %v237 = vunpack.c.l.b16 %v204
    %v238 = vunpack.c.l.b16 %v205
    %v239 = vunpack.c.l.b16 %v206
    %v240 = vunpack.c.l.b16 %v207
    %v241 = vunpack.c.l.b16 %v208
    %v242 = vpack.c.b16 %v227, %v226
    %v243 = vpack.c.b16 %v229, %v228
    %v244 = vpack.c.b16 %v231, %v230
    %v245 = vpack.c.b16 %v233, %v232
    %v246 = vpack.c.b16 %v235, %v234
    %v247 = vpack.c.b16 %v237, %v236
    %v248 = vpack.c.b16 %v239, %v238
    %v249 = vpack.c.b16 %v241, %v240
    %258 = vmatpush.bf16.msra.mxu0 %v249
    %259 = vmatpush.bf16.msra.mxu0 %v248
    %260 = vmatpush.bf16.msra.mxu0 %v247
    %261 = vmatpush.bf16.msra.mxu0 %v246
    %262 = vmatpush.bf16.msra.mxu0 %v245
    %263 = vmatpush.bf16.msra.mxu0 %v244
    %264 = vmatpush.bf16.msra.mxu0 %v243
    %265 = vmatpush.bf16.msra.mxu0 %v242
    %266 = vmatmul.bf16.gmra.mxu0 %v192
    %v267 = vpop.f32.mrf.mxu0
    %v268 = vadd.f32 %v209, %v267
    %v269 = vpop.f32.mrf.mxu0
    %v270 = vadd.f32 %v209, %v269
    %271 = vdwg.mxu0
    %v272 = vadd.f32 %v268, %v93
    %v273 = vadd.f32 %v270, %v94
    %v274 = vsel %vm95, %v272, 0.0
    %275 = vadd.xlane.f32.xlu0 %v274
    %v276 = vpop.xlane.xlu0 %275
    %v277 = vsel %vm95, %v273, 0.0
    %278 = vadd.xlane.f32.xlu0 %v277
    %v279 = vpop.xlane.xlu0 %278
    %v280 = vmul.f32 %v276, %v108
    %v281 = vmul.f32 %v279, %v108
    %v282 = vsub.f32 %v272, %v280
    %v283 = vsub.f32 %v273, %v281
    %v284 = vmul.f32 %v282, %v282
    %v285 = vmul.f32 %v283, %v283
    %v286 = vsel %vm95, %v284, 0.0
    %287 = vadd.xlane.f32.xlu0 %v286
    %v288 = vpop.xlane.xlu0 %287
    %v289 = vsel %vm95, %v285, 0.0
    %290 = vadd.xlane.f32.xlu0 %v289
    %v291 = vpop.xlane.xlu0 %290
    %v292 = vmul.f32 %v288, %v108
    %v293 = vmul.f32 %v291, %v108
    %v294 = vadd.f32 %v292, 1e-12
    %v295 = vadd.f32 %v293, 1e-12
    %v296 = vrsqrt.pop %v294
    %v297 = vmul.f32 %v296, %v294
    %v298 = vmul.f32 %v297, %v296
    %v299 = vmul.f32 0.5, %v298
    %v300 = vsub.f32 1.5, %v299
    %v301 = vmul.f32 %v296, %v300
    %vm302 = vweird.f32 %v294
    %vm303 = vweird.f32 %v296
    %vm304 = vmor %vm302, %vm303
    %v305 = vsel %vm304, %v296, %v301
    %v306 = vrsqrt.pop %v295
    %v307 = vmul.f32 %v306, %v295
    %v308 = vmul.f32 %v307, %v306
    %v309 = vmul.f32 0.5, %v308
    %v310 = vsub.f32 1.5, %v309
    %v311 = vmul.f32 %v306, %v310
    %vm312 = vweird.f32 %v295
    %vm313 = vweird.f32 %v306
    %vm314 = vmor %vm312, %vm313
    %v315 = vsel %vm314, %v306, %v311
    %v316 = vmul.f32 %v282, %v305
    %v317 = vmul.f32 %v283, %v315
    %v318 = vmul.f32 %v316, %v147
    %v319 = vmul.f32 %v317, %v147
    %v320 = vadd.f32 %v318, %v150
    %v321 = vadd.f32 %v319, %v150
    %322 = vst.msk [vmem:[#allocation2] sm:$0xff] %vm95, %v320
    %323 = vst.msk [vmem:[#allocation2 + $0x8] sm:$0xff] %vm95, %v321
    // Predicated region
    $region30: #{tpu_custom_call.1} parent=1 // pred_check
      _
    $region31: #{tpu_custom_call.1} parent=1 // pred_check_branch
      %325 = sbr.rel (0) target = $region33
    $region32: #{tpu_custom_call.1} parent=1 // pred_region
      %327 = vsyncadd [#allocation3], 0
      %s328 = sshll.u32 [#allocation2], 4
      %s329 = int_to_ptr.vmem [resolvable:$true] %s328
      %s330 = sshll.u32 %s7, 4
      %s331 = int_to_ptr.hbm [resolvable:$true] %s330
      %336 = dma.vmem_to_hbm [thread:$0]  %s329, 256, %s331, [#allocation3], 128, 128, 8
    $region33: #{tpu_custom_call.1} parent=1 // pred_fallthru
      _
    // Predicated region
    $region34: #{tpu_custom_call.1} parent=1 // pred_check
      _
    $region35: #{tpu_custom_call.1} parent=1 // pred_check_branch
      %338 = sbr.rel (0) target = $region37
    $region36: #{tpu_custom_call.1} parent=1 // pred_region
      %340 = dma.done [#allocation3], 256
    $region37: #{tpu_custom_call.1} parent=1 // pred_fallthru
      _
    %341 = vsyncpa [#allocation3], 1

</llo_original>
